<compile_context>
chip_gen: v7x
topology: tpu7x:2x2x1
jax: 0.10.0
libtpu: 0.0.40
codegen_flags: <defaults>
</compile_context>

<pallas_src>
import functools

import jax
import jax.numpy as jnp
from jax.experimental import pallas as pl
from jax.experimental.pallas import tpu as pltpu


def _module_padding(h, w, kernel_size, strides):
    """Replicates the exact padding arithmetic of resnet_block.__init__.

    Note: faithfully reproduces the original module (p0/p2 derived from W,
    p1/p3 from H, passed to ZeroPad2d((left, right, top, bottom))).
    """
    p0 = strides * (w - 1) + kernel_size - w
    if p0 % 2 == 0:
        p0 = p0 // 2
        p2 = p0
    else:
        p2 = (p0 + 1) // 2
        p0 = (p0 - 1) // 2
    p1 = strides * (h - 1) + kernel_size - h
    if p1 % 2 == 0:
        p1 = p1 // 2
        p3 = p1
    else:
        p3 = (p1 + 1) // 2
        p1 = (p1 - 1) // 2
    # ZeroPad2d((left=p0, right=p1, top=p2, bottom=p3))
    return int(p0), int(p1), int(p2), int(p3)


def _conv_bn_act_kernel(x_ref, w_ref, scale_ref, shift_ref, o_ref,
                        xpad_ref, p_ref, *,
                        H, W, C, K, pad_top, pad_left, apply_relu):
    """One batch element per grid step (stride 1, 'same' padding => Ho=H, Wo=W).

    x_ref     : (1, C, H*W)            input image, spatial flattened (lane-dense)
    w_ref     : (F, K*K*C)   bf16      conv weight, columns ordered (kh, kw, c)
    scale_ref : (F, 1)       f32       gamma * rsqrt(var + eps)
    shift_ref : (F, 1)       f32       beta + (bias - mean) * scale
    o_ref     : (1, F, H*W)            output, spatial flattened (lane-dense)
    xpad_ref  : (C, pad_left + (H+pad_top+pad_bot)*W + pad_right)  f32 VMEM scratch
                (flat zero-padded image: ZeroPad2d fused here)
    p_ref     : (K*K*C, H*W) f32 VMEM scratch -- im2col tile
    """
    HW = H * W

    # --- fused ZeroPad2d: zero the flat scratch, write the image interior ----
    # (re-zeroed every step: cheap and safe under megacore grid sharding)
    xpad_ref[...] = jnp.zeros_like(xpad_ref)
    interior = pad_left + pad_top * W
    xpad_ref[:, interior:interior + HW] = x_ref[0]

    # --- build the im2col tile: P[(kh*K+kw)*C + c, ho*W + wo] = xpad[c, ho+kh, wo+kw]
    # Each tap is a *contiguous* slice of the flat padded image; the horizontal
    # shift only needs a column-validity mask (no roll / reshape / transpose).
    col = jax.lax.broadcasted_iota(jnp.int32, (C, HW), 1) % W
    for kh in range(K):
        for kw in range(K):
            t = kh * K + kw
            d = kw - pad_left                       # horizontal offset of this tap
            start = kh * W + kw                     # flat start inside xpad scratch
            slab = xpad_ref[:, start:start + HW]    # (C, H*W)
            if d != 0:
                valid = (col + d >= 0) & (col + d < W)
                slab = jnp.where(valid, slab, 0.0)
            p_ref[t * C:(t + 1) * C, :] = slab

    # --- one fat MXU contraction (depth K*K*C) in bf16, f32 accumulation -----
    acc = jnp.dot(w_ref[...], p_ref[...].astype(jnp.bfloat16),
                  preferred_element_type=jnp.float32)           # (F, H*W)

    # --- fused bias + BatchNorm (pre-folded) + activation, f32 epilogue ------
    y = acc * scale_ref[...] + shift_ref[...]
    if apply_relu:
        y = jnp.maximum(y, 0.0)
    o_ref[0] = y.astype(o_ref.dtype)


def resnet_block_forward(x_nchw, params, *, kernel_size=3, strides=1,
                         eps=1e-5, apply_relu=True):
    if strides != 1:
        # TODO(synk): strided conv path (output spatial != input spatial) not implemented.
        raise NotImplementedError("only the default strides=1 path is implemented")

    n, c, h, w = x_nchw.shape
    f = params["w"].shape[0]
    k = kernel_size

    pad_left, pad_right, pad_top, pad_bot = _module_padding(h, w, k, strides)
    # stride=1 module padding always yields "same" output spatial size
    assert pad_left + pad_right == k - 1 and pad_top + pad_bot == k - 1
    hw = h * w
    l_flat = pad_left + (h + pad_top + pad_bot) * w + pad_right

    # PyTorch Conv2d weight (F, C, K, K) -> (F, K*K*C), columns ordered (kh, kw, c).
    w_mat = jnp.transpose(params["w"], (2, 3, 1, 0)).reshape(k * k * c, f).T
    w_mat = w_mat.astype(jnp.bfloat16)

    # Fold conv bias + BatchNorm (eval) into per-channel scale/shift.
    scale = params["gamma"] * jax.lax.rsqrt(params["var"] + eps)
    shift = params["beta"] + (params["b"] - params["mean"]) * scale
    scale = scale.reshape(f, 1).astype(jnp.float32)
    shift = shift.reshape(f, 1).astype(jnp.float32)

    # Free (metadata-only) reshape: stay NCHW-native, spatial flattened on lanes.
    x_flat = x_nchw.reshape(n, c, hw)

    kern = functools.partial(_conv_bn_act_kernel, H=h, W=w, C=c, K=k,
                             pad_top=pad_top, pad_left=pad_left,
                             apply_relu=apply_relu)

    out_flat = pl.pallas_call(
        kern,
        out_shape=jax.ShapeDtypeStruct((n, f, hw), x_nchw.dtype),
        grid=(n,),
        in_specs=[
            pl.BlockSpec((1, c, hw), lambda i: (i, 0, 0)),        # x (per image)
            pl.BlockSpec((f, k * k * c), lambda i: (0, 0)),       # weights (resident)
            pl.BlockSpec((f, 1), lambda i: (0, 0)),               # scale
            pl.BlockSpec((f, 1), lambda i: (0, 0)),               # shift
        ],
        out_specs=pl.BlockSpec((1, f, hw), lambda i: (i, 0, 0)),
        scratch_shapes=[
            pltpu.VMEM((c, l_flat), jnp.float32),                 # flat padded image
            pltpu.VMEM((k * k * c, hw), jnp.float32),             # im2col tile
        ],
        compiler_params=pltpu.CompilerParams(
            dimension_semantics=("parallel",),
            vmem_limit_bytes=32 * 1024 * 1024),
    )(x_flat, w_mat, scale, shift)

    # TODO(synk): for large spatial sizes add an output-row grid axis (halo DMA);
    # per-image blocks are well within VMEM for CIFAR-scale ResNet-20 shapes.
    return out_flat.reshape(n, f, h, w)


def _reference(x_nchw, params, *, kernel_size=3, strides=1, eps=1e-5,
               apply_relu=True):
    """Pure-JAX f32 reference (correctness check only)."""
    n, c, h, w = x_nchw.shape
    p0, p1, p2, p3 = _module_padding(h, w, kernel_size, strides)
    xp = jnp.pad(x_nchw, ((0, 0), (0, 0), (p2, p3), (p0, p1)))
    y = jax.lax.conv_general_dilated(
        xp, params["w"], window_strides=(strides, strides), padding="VALID",
        dimension_numbers=("NCHW", "OIHW", "NCHW"))
    y = y + params["b"][None, :, None, None]
    inv = jax.lax.rsqrt(params["var"] + eps)
    y = ((y - params["mean"][None, :, None, None])
         * (inv * params["gamma"])[None, :, None, None]
         + params["beta"][None, :, None, None])
    if apply_relu:
        y = jnp.maximum(y, 0.0)
    return y


if __name__ == "__main__":
    # input_size (C, H, W) = (4, 16, 16), batch=2, num_filters=8, kernel=3, stride=1
    N, C, H, W = 2, 4, 16, 16
    F, K = 8, 3

    key = jax.random.PRNGKey(0)
    kx, kw_, kb, kg, kbe, km, kv = jax.random.split(key, 7)

    x = jax.random.normal(kx, (N, C, H, W), dtype=jnp.float32)
    params = dict(
        w=0.1 * jax.random.normal(kw_, (F, C, K, K), dtype=jnp.float32),
        b=0.1 * jax.random.normal(kb, (F,), dtype=jnp.float32),
        gamma=1.0 + 0.1 * jax.random.normal(kg, (F,), dtype=jnp.float32),
        beta=0.1 * jax.random.normal(kbe, (F,), dtype=jnp.float32),
        mean=0.1 * jax.random.normal(km, (F,), dtype=jnp.float32),
        var=0.5 + jax.random.uniform(kv, (F,), dtype=jnp.float32),
    )

    fwd = jax.jit(resnet_block_forward)
    out = jax.block_until_ready(fwd(x, params))
    ref = jax.block_until_ready(_reference(x, params))

    assert out.shape == (N, F, H, W), out.shape
    max_err = float(jnp.max(jnp.abs(out - ref)))
    # bf16 MXU operands with f32 accumulation -> loosened tolerance vs f32 reference
    assert jnp.allclose(out, ref, atol=3e-2, rtol=3e-2), max_err

    print("KERNEL_OK")
</pallas_src>

<mosaic_0001>
module attributes {stable_mosaic.version = 11 : i64} {
  func.func @_conv_bn_act_kernel(%arg0: i32, %arg1: memref<1x4x256xf32, #tpu.memory_space<vmem>>, %arg2: memref<8x36xbf16, #tpu.memory_space<vmem>>, %arg3: memref<8x1xf32, #tpu.memory_space<vmem>>, %arg4: memref<8x1xf32, #tpu.memory_space<vmem>>, %arg5: memref<1x8x256xf32, #tpu.memory_space<vmem>>, %arg6: memref<4x290xf32, #tpu.memory_space<vmem>>, %arg7: memref<36x256xf32, #tpu.memory_space<vmem>>) attributes {dimension_semantics = [#tpu.dimension_semantics<parallel>], iteration_bounds = array<i64: 2>, scalar_prefetch = 0 : i64, scratch_operands = 2 : i64, tpu.core_type = #tpu.core_type<tc>, window_params = [{transform_indices = @transform_0, window_bounds = array<i64: 1, 4, 256>}, {pipeline_mode = #tpu.pipeline_mode<synchronous>, transform_indices = @transform_1, window_bounds = array<i64: 8, 36>}, {pipeline_mode = #tpu.pipeline_mode<synchronous>, transform_indices = @transform_2, window_bounds = array<i64: 8, 1>}, {pipeline_mode = #tpu.pipeline_mode<synchronous>, transform_indices = @transform_3, window_bounds = array<i64: 8, 1>}, {transform_indices = @transform_4, window_bounds = array<i64: 1, 8, 256>}]} {
    %cst = arith.constant 0.000000e+00 : f32
    %0 = vector.broadcast %cst : f32 to vector<4x290xf32>
    %c0 = arith.constant 0 : index
    %c0_0 = arith.constant 0 : index
    %1 = vector.load %arg6[%c0, %c0_0] : memref<4x290xf32, #tpu.memory_space<vmem>>, vector<4x290xf32>
    tpu.vector_store %arg6[%c0, %c0_0], %0 {strides = array<i32>} : memref<4x290xf32, #tpu.memory_space<vmem>>, vector<4x290xf32>,
    %c0_1 = arith.constant 0 : index
    %c0_2 = arith.constant 0 : index
    %c0_3 = arith.constant 0 : index
    %2 = vector.load %arg1[%c0_1, %c0_2, %c0_3] : memref<1x4x256xf32, #tpu.memory_space<vmem>>, vector<1x4x256xf32>
    %3 = vector.shape_cast %2 : vector<1x4x256xf32> to vector<4x256xf32>
    %c0_4 = arith.constant 0 : index
    %c17 = arith.constant 17 : index
    %4 = vector.load %arg6[%c0_4, %c17] : memref<4x290xf32, #tpu.memory_space<vmem>>, vector<4x256xf32>
    tpu.vector_store %arg6[%c0_4, %c17], %3 {strides = array<i32>} : memref<4x290xf32, #tpu.memory_space<vmem>>, vector<4x256xf32>,
    %5 = tpu.iota {dimensions = array<i32: 1>} : vector<4x256xi32>
    %c16_i32 = arith.constant 16 : i32
    %c0_i32 = arith.constant 0 : i32
    %6 = arith.cmpi eq, %c16_i32, %c0_i32 : i32
    %c1_i32 = arith.constant 1 : i32
    %7 = arith.select %6, %c1_i32, %c16_i32 : i32
    %8 = vector.broadcast %7 : i32 to vector<4x256xi32>
    %9 = arith.remsi %5, %8 : vector<4x256xi32>
    %c0_i32_5 = arith.constant 0 : i32
    %10 = vector.broadcast %c0_i32_5 : i32 to vector<4x256xi32>
    %11 = arith.cmpi ne, %9, %10 : vector<4x256xi32>
    %c0_i32_6 = arith.constant 0 : i32
    %12 = vector.broadcast %c0_i32_6 : i32 to vector<4x256xi32>
    %13 = arith.cmpi slt, %9, %12 : vector<4x256xi32>
    %c0_i32_7 = arith.constant 0 : i32
    %14 = arith.cmpi slt, %7, %c0_i32_7 : i32
    %15 = vector.broadcast %14 : i1 to vector<4x256xi1>
    %16 = vector.broadcast %15 : vector<4x256xi1> to vector<4x256xi1>
    %17 = arith.xori %13, %16 : vector<4x256xi1>
    %18 = arith.andi %17, %11 : vector<4x256xi1>
    %19 = vector.broadcast %7 : i32 to vector<4x256xi32>
    %20 = arith.addi %9, %19 : vector<4x256xi32>
    %21 = arith.select %18, %20, %9 : vector<4x256xi1>, vector<4x256xi32>
    %c0_8 = arith.constant 0 : index
    %c0_9 = arith.constant 0 : index
    %22 = vector.load %arg6[%c0_8, %c0_9] : memref<4x290xf32, #tpu.memory_space<vmem>>, vector<4x256xf32>
    %c-1_i32 = arith.constant -1 : i32
    %23 = vector.broadcast %c-1_i32 : i32 to vector<4x256xi32>
    %24 = arith.addi %21, %23 : vector<4x256xi32>
    %c0_i32_10 = arith.constant 0 : i32
    %25 = vector.broadcast %c0_i32_10 : i32 to vector<4x256xi32>
    %26 = arith.cmpi sge, %24, %25 : vector<4x256xi32>
    %c-1_i32_11 = arith.constant -1 : i32
    %27 = vector.broadcast %c-1_i32_11 : i32 to vector<4x256xi32>
    %28 = arith.addi %21, %27 : vector<4x256xi32>
    %c16_i32_12 = arith.constant 16 : i32
    %29 = vector.broadcast %c16_i32_12 : i32 to vector<4x256xi32>
    %30 = arith.cmpi slt, %28, %29 : vector<4x256xi32>
    %31 = arith.andi %26, %30 : vector<4x256xi1>
    %cst_13 = arith.constant 0.000000e+00 : f32
    %32 = vector.broadcast %cst_13 : f32 to vector<4x256xf32>
    %33 = arith.select %31, %22, %32 : vector<4x256xi1>, vector<4x256xf32>
    %c0_14 = arith.constant 0 : index
    %c0_15 = arith.constant 0 : index
    %34 = vector.load %arg7[%c0_14, %c0_15] : memref<36x256xf32, #tpu.memory_space<vmem>>, vector<4x256xf32>
    tpu.vector_store %arg7[%c0_14, %c0_15], %33 {strides = array<i32>} : memref<36x256xf32, #tpu.memory_space<vmem>>, vector<4x256xf32>,
    %c0_16 = arith.constant 0 : index
    %c1 = arith.constant 1 : index
    %35 = vector.load %arg6[%c0_16, %c1] : memref<4x290xf32, #tpu.memory_space<vmem>>, vector<4x256xf32>
    %c4 = arith.constant 4 : index
    %c0_17 = arith.constant 0 : index
    %36 = vector.load %arg7[%c4, %c0_17] : memref<36x256xf32, #tpu.memory_space<vmem>>, vector<4x256xf32>
    tpu.vector_store %arg7[%c4, %c0_17], %35 {strides = array<i32>} : memref<36x256xf32, #tpu.memory_space<vmem>>, vector<4x256xf32>,
    %c0_18 = arith.constant 0 : index
    %c2 = arith.constant 2 : index
    %37 = vector.load %arg6[%c0_18, %c2] : memref<4x290xf32, #tpu.memory_space<vmem>>, vector<4x256xf32>
    %c1_i32_19 = arith.constant 1 : i32
    %38 = vector.broadcast %c1_i32_19 : i32 to vector<4x256xi32>
    %39 = arith.addi %21, %38 : vector<4x256xi32>
    %c0_i32_20 = arith.constant 0 : i32
    %40 = vector.broadcast %c0_i32_20 : i32 to vector<4x256xi32>
    %41 = arith.cmpi sge, %39, %40 : vector<4x256xi32>
    %c1_i32_21 = arith.constant 1 : i32
    %42 = vector.broadcast %c1_i32_21 : i32 to vector<4x256xi32>
    %43 = arith.addi %21, %42 : vector<4x256xi32>
    %c16_i32_22 = arith.constant 16 : i32
    %44 = vector.broadcast %c16_i32_22 : i32 to vector<4x256xi32>
    %45 = arith.cmpi slt, %43, %44 : vector<4x256xi32>
    %46 = arith.andi %41, %45 : vector<4x256xi1>
    %cst_23 = arith.constant 0.000000e+00 : f32
    %47 = vector.broadcast %cst_23 : f32 to vector<4x256xf32>
    %48 = arith.select %46, %37, %47 : vector<4x256xi1>, vector<4x256xf32>
    %c8 = arith.constant 8 : index
    %c0_24 = arith.constant 0 : index
    %49 = vector.load %arg7[%c8, %c0_24] : memref<36x256xf32, #tpu.memory_space<vmem>>, vector<4x256xf32>
    tpu.vector_store %arg7[%c8, %c0_24], %48 {strides = array<i32>} : memref<36x256xf32, #tpu.memory_space<vmem>>, vector<4x256xf32>,
    %c0_25 = arith.constant 0 : index
    %c16 = arith.constant 16 : index
    %50 = vector.load %arg6[%c0_25, %c16] : memref<4x290xf32, #tpu.memory_space<vmem>>, vector<4x256xf32>
    %c-1_i32_26 = arith.constant -1 : i32
    %51 = vector.broadcast %c-1_i32_26 : i32 to vector<4x256xi32>
    %52 = arith.addi %21, %51 : vector<4x256xi32>
    %c0_i32_27 = arith.constant 0 : i32
    %53 = vector.broadcast %c0_i32_27 : i32 to vector<4x256xi32>
    %54 = arith.cmpi sge, %52, %53 : vector<4x256xi32>
    %c-1_i32_28 = arith.constant -1 : i32
    %55 = vector.broadcast %c-1_i32_28 : i32 to vector<4x256xi32>
    %56 = arith.addi %21, %55 : vector<4x256xi32>
    %c16_i32_29 = arith.constant 16 : i32
    %57 = vector.broadcast %c16_i32_29 : i32 to vector<4x256xi32>
    %58 = arith.cmpi slt, %56, %57 : vector<4x256xi32>
    %59 = arith.andi %54, %58 : vector<4x256xi1>
    %cst_30 = arith.constant 0.000000e+00 : f32
    %60 = vector.broadcast %cst_30 : f32 to vector<4x256xf32>
    %61 = arith.select %59, %50, %60 : vector<4x256xi1>, vector<4x256xf32>
    %c12 = arith.constant 12 : index
    %c0_31 = arith.constant 0 : index
    %62 = vector.load %arg7[%c12, %c0_31] : memref<36x256xf32, #tpu.memory_space<vmem>>, vector<4x256xf32>
    tpu.vector_store %arg7[%c12, %c0_31], %61 {strides = array<i32>} : memref<36x256xf32, #tpu.memory_space<vmem>>, vector<4x256xf32>,
    %c0_32 = arith.constant 0 : index
    %c17_33 = arith.constant 17 : index
    %63 = vector.load %arg6[%c0_32, %c17_33] : memref<4x290xf32, #tpu.memory_space<vmem>>, vector<4x256xf32>
    %c16_34 = arith.constant 16 : index
    %c0_35 = arith.constant 0 : index
    %64 = vector.load %arg7[%c16_34, %c0_35] : memref<36x256xf32, #tpu.memory_space<vmem>>, vector<4x256xf32>
    tpu.vector_store %arg7[%c16_34, %c0_35], %63 {strides = array<i32>} : memref<36x256xf32, #tpu.memory_space<vmem>>, vector<4x256xf32>,
    %c0_36 = arith.constant 0 : index
    %c18 = arith.constant 18 : index
    %65 = vector.load %arg6[%c0_36, %c18] : memref<4x290xf32, #tpu.memory_space<vmem>>, vector<4x256xf32>
    %c1_i32_37 = arith.constant 1 : i32
    %66 = vector.broadcast %c1_i32_37 : i32 to vector<4x256xi32>
    %67 = arith.addi %21, %66 : vector<4x256xi32>
    %c0_i32_38 = arith.constant 0 : i32
    %68 = vector.broadcast %c0_i32_38 : i32 to vector<4x256xi32>
    %69 = arith.cmpi sge, %67, %68 : vector<4x256xi32>
    %c1_i32_39 = arith.constant 1 : i32
    %70 = vector.broadcast %c1_i32_39 : i32 to vector<4x256xi32>
    %71 = arith.addi %21, %70 : vector<4x256xi32>
    %c16_i32_40 = arith.constant 16 : i32
    %72 = vector.broadcast %c16_i32_40 : i32 to vector<4x256xi32>
    %73 = arith.cmpi slt, %71, %72 : vector<4x256xi32>
    %74 = arith.andi %69, %73 : vector<4x256xi1>
    %cst_41 = arith.constant 0.000000e+00 : f32
    %75 = vector.broadcast %cst_41 : f32 to vector<4x256xf32>
    %76 = arith.select %74, %65, %75 : vector<4x256xi1>, vector<4x256xf32>
    %c20 = arith.constant 20 : index
    %c0_42 = arith.constant 0 : index
    %77 = vector.load %arg7[%c20, %c0_42] : memref<36x256xf32, #tpu.memory_space<vmem>>, vector<4x256xf32>
    tpu.vector_store %arg7[%c20, %c0_42], %76 {strides = array<i32>} : memref<36x256xf32, #tpu.memory_space<vmem>>, vector<4x256xf32>,
    %c0_43 = arith.constant 0 : index
    %c32 = arith.constant 32 : index
    %78 = vector.load %arg6[%c0_43, %c32] : memref<4x290xf32, #tpu.memory_space<vmem>>, vector<4x256xf32>
    %c-1_i32_44 = arith.constant -1 : i32
    %79 = vector.broadcast %c-1_i32_44 : i32 to vector<4x256xi32>
    %80 = arith.addi %21, %79 : vector<4x256xi32>
    %c0_i32_45 = arith.constant 0 : i32
    %81 = vector.broadcast %c0_i32_45 : i32 to vector<4x256xi32>
    %82 = arith.cmpi sge, %80, %81 : vector<4x256xi32>
    %c-1_i32_46 = arith.constant -1 : i32
    %83 = vector.broadcast %c-1_i32_46 : i32 to vector<4x256xi32>
    %84 = arith.addi %21, %83 : vector<4x256xi32>
    %c16_i32_47 = arith.constant 16 : i32
    %85 = vector.broadcast %c16_i32_47 : i32 to vector<4x256xi32>
    %86 = arith.cmpi slt, %84, %85 : vector<4x256xi32>
    %87 = arith.andi %82, %86 : vector<4x256xi1>
    %cst_48 = arith.constant 0.000000e+00 : f32
    %88 = vector.broadcast %cst_48 : f32 to vector<4x256xf32>
    %89 = arith.select %87, %78, %88 : vector<4x256xi1>, vector<4x256xf32>
    %c24 = arith.constant 24 : index
    %c0_49 = arith.constant 0 : index
    %90 = vector.load %arg7[%c24, %c0_49] : memref<36x256xf32, #tpu.memory_space<vmem>>, vector<4x256xf32>
    tpu.vector_store %arg7[%c24, %c0_49], %89 {strides = array<i32>} : memref<36x256xf32, #tpu.memory_space<vmem>>, vector<4x256xf32>,
    %c0_50 = arith.constant 0 : index
    %c33 = arith.constant 33 : index
    %91 = vector.load %arg6[%c0_50, %c33] : memref<4x290xf32, #tpu.memory_space<vmem>>, vector<4x256xf32>
    %c28 = arith.constant 28 : index
    %c0_51 = arith.constant 0 : index
    %92 = vector.load %arg7[%c28, %c0_51] : memref<36x256xf32, #tpu.memory_space<vmem>>, vector<4x256xf32>
    tpu.vector_store %arg7[%c28, %c0_51], %91 {strides = array<i32>} : memref<36x256xf32, #tpu.memory_space<vmem>>, vector<4x256xf32>,
    %c0_52 = arith.constant 0 : index
    %c34 = arith.constant 34 : index
    %93 = vector.load %arg6[%c0_52, %c34] : memref<4x290xf32, #tpu.memory_space<vmem>>, vector<4x256xf32>
    %c1_i32_53 = arith.constant 1 : i32
    %94 = vector.broadcast %c1_i32_53 : i32 to vector<4x256xi32>
    %95 = arith.addi %21, %94 : vector<4x256xi32>
    %c0_i32_54 = arith.constant 0 : i32
    %96 = vector.broadcast %c0_i32_54 : i32 to vector<4x256xi32>
    %97 = arith.cmpi sge, %95, %96 : vector<4x256xi32>
    %c1_i32_55 = arith.constant 1 : i32
    %98 = vector.broadcast %c1_i32_55 : i32 to vector<4x256xi32>
    %99 = arith.addi %21, %98 : vector<4x256xi32>
    %c16_i32_56 = arith.constant 16 : i32
    %100 = vector.broadcast %c16_i32_56 : i32 to vector<4x256xi32>
    %101 = arith.cmpi slt, %99, %100 : vector<4x256xi32>
    %102 = arith.andi %97, %101 : vector<4x256xi1>
    %cst_57 = arith.constant 0.000000e+00 : f32
    %103 = vector.broadcast %cst_57 : f32 to vector<4x256xf32>
    %104 = arith.select %102, %93, %103 : vector<4x256xi1>, vector<4x256xf32>
    %c32_58 = arith.constant 32 : index
    %c0_59 = arith.constant 0 : index
    %105 = vector.load %arg7[%c32_58, %c0_59] : memref<36x256xf32, #tpu.memory_space<vmem>>, vector<4x256xf32>
    tpu.vector_store %arg7[%c32_58, %c0_59], %104 {strides = array<i32>} : memref<36x256xf32, #tpu.memory_space<vmem>>, vector<4x256xf32>,
    %c0_60 = arith.constant 0 : index
    %c0_61 = arith.constant 0 : index
    %106 = vector.load %arg2[%c0_60, %c0_61] : memref<8x36xbf16, #tpu.memory_space<vmem>>, vector<8x36xbf16>
    %c0_62 = arith.constant 0 : index
    %c0_63 = arith.constant 0 : index
    %107 = vector.load %arg7[%c0_62, %c0_63] : memref<36x256xf32, #tpu.memory_space<vmem>>, vector<36x256xf32>
    %108 = arith.truncf %107 : vector<36x256xf32> to vector<36x256xbf16>
    %cst_64 = arith.constant dense<0.000000e+00> : vector<8x256xf32>
    %109 = tpu.matmul %106, %108, %cst_64 {dimension_numbers = #tpu.dot_dimension_numbers<[1], [0], [0], [1], [0, 0, 1, 1], [], []>} : vector<8x36xbf16>, vector<36x256xbf16>, vector<8x256xf32> -> vector<8x256xf32>
    %c0_65 = arith.constant 0 : index
    %c0_66 = arith.constant 0 : index
    %110 = vector.load %arg3[%c0_65, %c0_66] : memref<8x1xf32, #tpu.memory_space<vmem>>, vector<8x1xf32>
    %111 = vector.broadcast %110 : vector<8x1xf32> to vector<8x256xf32>
    %112 = arith.mulf %109, %111 : vector<8x256xf32>
    %c0_67 = arith.constant 0 : index
    %c0_68 = arith.constant 0 : index
    %113 = vector.load %arg4[%c0_67, %c0_68] : memref<8x1xf32, #tpu.memory_space<vmem>>, vector<8x1xf32>
    %114 = vector.broadcast %113 : vector<8x1xf32> to vector<8x256xf32>
    %115 = arith.addf %112, %114 : vector<8x256xf32>
    %cst_69 = arith.constant 0.000000e+00 : f32
    %116 = vector.broadcast %cst_69 : f32 to vector<8x256xf32>
    %117 = arith.maximumf %115, %116 : vector<8x256xf32>
    %c0_70 = arith.constant 0 : index
    %c0_71 = arith.constant 0 : index
    %c0_72 = arith.constant 0 : index
    %118 = vector.load %arg5[%c0_70, %c0_71, %c0_72] : memref<1x8x256xf32, #tpu.memory_space<vmem>>, vector<1x8x256xf32>
    %119 = vector.shape_cast %118 : vector<1x8x256xf32> to vector<8x256xf32>
    %120 = vector.shape_cast %117 : vector<8x256xf32> to vector<1x8x256xf32>
    tpu.vector_store %arg5[%c0_70, %c0_71, %c0_72], %120 {strides = array<i32>} : memref<1x8x256xf32, #tpu.memory_space<vmem>>, vector<1x8x256xf32>,
    return
  }
  func.func @transform_0(%arg0: i32) -> (i32, i32, i32) {
    %c0_i32 = arith.constant 0 : i32
    %c0_i32_0 = arith.constant 0 : i32
    %c0_i32_1 = arith.constant 0 : i32
    return %arg0, %c0_i32, %c0_i32_0 : i32, i32, i32
  }
  func.func @transform_1(%arg0: i32) -> (i32, i32) {
    %c0_i32 = arith.constant 0 : i32
    %c0_i32_0 = arith.constant 0 : i32
    %c0_i32_1 = arith.constant 0 : i32
    return %c0_i32, %c0_i32_0 : i32, i32
  }
  func.func @transform_2(%arg0: i32) -> (i32, i32) {
    %c0_i32 = arith.constant 0 : i32
    %c0_i32_0 = arith.constant 0 : i32
    %c0_i32_1 = arith.constant 0 : i32
    return %c0_i32, %c0_i32_0 : i32, i32
  }
  func.func @transform_3(%arg0: i32) -> (i32, i32) {
    %c0_i32 = arith.constant 0 : i32
    %c0_i32_0 = arith.constant 0 : i32
    %c0_i32_1 = arith.constant 0 : i32
    return %c0_i32, %c0_i32_0 : i32, i32
  }
  func.func @transform_4(%arg0: i32) -> (i32, i32, i32) {
    %c0_i32 = arith.constant 0 : i32
    %c0_i32_0 = arith.constant 0 : i32
    %c0_i32_1 = arith.constant 0 : i32
    return %arg0, %c0_i32, %c0_i32_0 : i32, i32, i32
  }
}

</mosaic_0001>

<llo_original>
// kernel: resnet_block_forward.1
$region0: #{resnet_block_forward.1}
  #allocation0 [shape = 'u32[]', space=smem, size = 0x4, offset = 0x4, fixed_abs, tag = 'smem constant byte address 0x4 - core index']
  #allocation1 [shape = 'u32[144,128]{1,0:T(1,128)}', space=vmem, size = 0x12000, scoped, tag = 'internal scratch']
  #allocation2 [shape = 'f32[4,290]{1,0:T(4,128)}', space=vmem, size = 0x1800, scoped, tag = 'scratch operand']
  #allocation3 [shape = 'f32[36,256]{1,0:T(8,128)}', space=vmem, size = 0xa000, scoped, tag = 'scratch operand']
  %s0 = inlined_call_operand.vmem [shape: f32[2,4,256], index: 0, kind: input, shape index: {}]
  %s1 = inlined_call_operand.vmem [shape: bf16[8,36], index: 1, kind: input, shape index: {}]
  %s2 = inlined_call_operand.vmem [shape: f32[8,1], index: 2, kind: input, shape index: {}]
  %s3 = inlined_call_operand.vmem [shape: f32[8,1], index: 3, kind: input, shape index: {}]
  %s4 = inlined_call_operand.vmem [shape: f32[2,8,256], index: 4, kind: output, shape index: {}]
  %s5 = sld [smem:[#allocation0]]
  $region49: #{resnet_block_forward.1} parent=0
    _
  %s7 = ssub.s32 1, %s5
  %s8 = scalar_select 0, %s7, %s5
  loop: start=0, step=1, limit=4
  $region2: #{resnet_block_forward.1} parent=0 // loop_pre_header
    _
  $region3: #{resnet_block_forward.1} parent=0 // loop_header
    %s10 = sphi 0, %s14
    %p11 = scmp.ge.s32.totalorder %s10, 4
    %s20 = sphi 0, %s22
    %s23 = sphi 0, %s20
    %s24 = sphi 0, %s23
    %s40 = sphi 0, %s24
    %s44 = sphi 0, %s44
    %s46 = sphi 0, %s44
    %s47 = sphi 0, %s46
    %s61 = sphi 0, %s47
    %s65 = sphi 0, %s65
    %s67 = sphi 0, %s65
    %s68 = sphi 0, %s67
    %s82 = sphi 0, %s68
    %s86 = sphi 0, %s86
    %s88 = sphi 0, %s86
    %s89 = sphi 0, %s88
    %s103 = sphi 0, %s89
    %s109 = sphi 0, %s111
    %s112 = sphi 0, %s109
    %s113 = sphi 0, %s112
    %s129 = sphi 0, %s113
  $region4: #{resnet_block_forward.1} parent=0 // loop_header_branch
    %13 = sbr.rel (%p11) target = $region8
  $region5: #{resnet_block_forward.1} parent=0 // loop_body
    %s15 = ssub.s32 %s10, 1
    %s16 = ssub.s32 %s10, 2
    %s17 = sadd.s32 %s10, 1
    %s18 = ssub.s32 %s10, %s17
    %p19 = scmp.eq.s32.totalorder %s18, 0
    %s21 = sadd.s32 %s20, 1
    %s22 = scalar_select %p19, %s20, %s21
    %p25 = pneg %p19
    %p26 = scmp.eq.s32.totalorder %s10, 1
    %p27 = por %p25, %p26
    %p28 = scmp.ne.s32.totalorder %s20, %s23
    %p29 = scmp.eq.s32.totalorder %s10, 0
    %p30 = por %p28, %p29
    %p31 = scmp.ne.s32.totalorder %s20, %s23
    %p32 = scmp.eq.s32.totalorder %s15, 1
    %p33 = por %p31, %p32
    %p34 = scmp.ne.s32.totalorder %s23, %s24
    %p35 = scmp.eq.s32.totalorder %s15, 0
    %p36 = por %p34, %p35
    %p37 = scmp.ne.s32.totalorder %s23, %s24
    %p38 = scmp.eq.s32.totalorder %s16, 1
    %p39 = por %p37, %p38
    %p41 = scmp.ne.s32.totalorder %s24, %s40
    %p42 = scmp.eq.s32.totalorder %s16, 0
    %p43 = por %p41, %p42
    %s45 = sadd.s32 %s44, 1
    %p48 = scmp.eq.s32.totalorder %s10, 1
    %p49 = scmp.ne.s32.totalorder %s44, %s46
    %p50 = scmp.eq.s32.totalorder %s10, 0
    %p51 = por %p49, %p50
    %p52 = scmp.ne.s32.totalorder %s44, %s46
    %p53 = scmp.eq.s32.totalorder %s15, 1
    %p54 = por %p52, %p53
    %p55 = scmp.ne.s32.totalorder %s46, %s47
    %p56 = scmp.eq.s32.totalorder %s15, 0
    %p57 = por %p55, %p56
    %p58 = scmp.ne.s32.totalorder %s46, %s47
    %p59 = scmp.eq.s32.totalorder %s16, 1
    %p60 = por %p58, %p59
    %p62 = scmp.ne.s32.totalorder %s47, %s61
    %p63 = scmp.eq.s32.totalorder %s16, 0
    %p64 = por %p62, %p63
    %s66 = sadd.s32 %s65, 1
    %p69 = scmp.eq.s32.totalorder %s10, 1
    %p70 = scmp.ne.s32.totalorder %s65, %s67
    %p71 = scmp.eq.s32.totalorder %s10, 0
    %p72 = por %p70, %p71
    %p73 = scmp.ne.s32.totalorder %s65, %s67
    %p74 = scmp.eq.s32.totalorder %s15, 1
    %p75 = por %p73, %p74
    %p76 = scmp.ne.s32.totalorder %s67, %s68
    %p77 = scmp.eq.s32.totalorder %s15, 0
    %p78 = por %p76, %p77
    %p79 = scmp.ne.s32.totalorder %s67, %s68
    %p80 = scmp.eq.s32.totalorder %s16, 1
    %p81 = por %p79, %p80
    %p83 = scmp.ne.s32.totalorder %s68, %s82
    %p84 = scmp.eq.s32.totalorder %s16, 0
    %p85 = por %p83, %p84
    %s87 = sadd.s32 %s86, 1
    %p90 = scmp.eq.s32.totalorder %s10, 1
    %p91 = scmp.ne.s32.totalorder %s86, %s88
    %p92 = scmp.eq.s32.totalorder %s10, 0
    %p93 = por %p91, %p92
    %p94 = scmp.ne.s32.totalorder %s86, %s88
    %p95 = scmp.eq.s32.totalorder %s15, 1
    %p96 = por %p94, %p95
    %p97 = scmp.ne.s32.totalorder %s88, %s89
    %p98 = scmp.eq.s32.totalorder %s15, 0
    %p99 = por %p97, %p98
    %p100 = scmp.ne.s32.totalorder %s88, %s89
    %p101 = scmp.eq.s32.totalorder %s16, 1
    %p102 = por %p100, %p101
    %p104 = scmp.ne.s32.totalorder %s89, %s103
    %p105 = scmp.eq.s32.totalorder %s16, 0
    %p106 = por %p104, %p105
    %s107 = ssub.s32 %s10, %s17
    %p108 = scmp.eq.s32.totalorder %s107, 0
    %s110 = sadd.s32 %s109, 1
    %s111 = scalar_select %p108, %s109, %s110
    %p114 = pneg %p108
    %p115 = scmp.eq.s32.totalorder %s10, 1
    %p116 = por %p114, %p115
    %p117 = scmp.ne.s32.totalorder %s109, %s112
    %p118 = scmp.eq.s32.totalorder %s10, 0
    %p119 = por %p117, %p118
    %p120 = scmp.ne.s32.totalorder %s109, %s112
    %p121 = scmp.eq.s32.totalorder %s15, 1
    %p122 = por %p120, %p121
    %p123 = scmp.ne.s32.totalorder %s112, %s113
    %p124 = scmp.eq.s32.totalorder %s15, 0
    %p125 = por %p123, %p124
    %p126 = scmp.ne.s32.totalorder %s112, %s113
    %p127 = scmp.eq.s32.totalorder %s16, 1
    %p128 = por %p126, %p127
    %p130 = scmp.ne.s32.totalorder %s113, %s129
    %p131 = scmp.eq.s32.totalorder %s16, 0
    %p132 = por %p130, %p131
    %p133 = scmp.le.s32.totalorder 1, %s10
    %p134 = scmp.lt.s32.totalorder %s10, 3
    %p135 = pnand %p133, %p134
    %p136 = pneg %p135
    // Predicated region
    $region9: #{resnet_block_forward.1} parent=5 // pred_check
      _
    $region10: #{resnet_block_forward.1} parent=5 // pred_check_branch
      %138 = sbr.rel (%p135) target = $region12
    $region11: #{resnet_block_forward.1} parent=5 // pred_region
      %s139 = ssub.s32 %s10, 1
      // Predicated region
      $region13: #{resnet_block_forward.1} parent=11 // pred_check
        %p140 = pneg %p57
      $region14: #{resnet_block_forward.1} parent=11 // pred_check_branch
        %142 = sbr.rel (%p140) target = $region16
      $region15: #{resnet_block_forward.1} parent=11 // pred_region
        _
      $region16: #{resnet_block_forward.1} parent=11 // pred_fallthru
        _
      // Predicated region
      $region17: #{resnet_block_forward.1} parent=11 // pred_check
        %p143 = pneg %p78
      $region18: #{resnet_block_forward.1} parent=11 // pred_check_branch
        %145 = sbr.rel (%p143) target = $region20
      $region19: #{resnet_block_forward.1} parent=11 // pred_region
        _
      $region20: #{resnet_block_forward.1} parent=11 // pred_fallthru
        _
      // Predicated region
      $region21: #{resnet_block_forward.1} parent=11 // pred_check
        %p146 = pneg %p99
      $region22: #{resnet_block_forward.1} parent=11 // pred_check_branch
        %148 = sbr.rel (%p146) target = $region24
      $region23: #{resnet_block_forward.1} parent=11 // pred_region
        _
      $region24: #{resnet_block_forward.1} parent=11 // pred_fallthru
        _
    $region12: #{resnet_block_forward.1} parent=5 // pred_fallthru
      _
    %p149 = scmp.lt.s32.totalorder %s10, 2
    // Predicated region
    $region25: #{resnet_block_forward.1} parent=5 // pred_check
      %p150 = pneg %p149
    $region26: #{resnet_block_forward.1} parent=5 // pred_check_branch
      %152 = sbr.rel (%p150) target = $region28
    $region27: #{resnet_block_forward.1} parent=5 // pred_region
      // Predicated region
      $region29: #{resnet_block_forward.1} parent=27 // pred_check
        %p153 = pneg %p30
      $region30: #{resnet_block_forward.1} parent=27 // pred_check_branch
        %155 = sbr.rel (%p153) target = $region32
      $region31: #{resnet_block_forward.1} parent=27 // pred_region
        %p156 = scmp.lt.s32.totalorder %s10, 1
        %s157 = scalar_select %p156, %s10, 1
        %s158 = smul.addr %s157, 2
        %s159 = smul.addr %s158, 4
        %s160 = scalar_lea.vmem %s0, %s159
      $region32: #{resnet_block_forward.1} parent=27 // pred_fallthru
        _
    $region28: #{resnet_block_forward.1} parent=5 // pred_fallthru
      _
    %p161 = scmp.le.s32.totalorder 1, %s10
    %p162 = scmp.lt.s32.totalorder %s10, 3
    %p163 = pnand %p161, %p162
    %p164 = pneg %p163
    // Predicated region
    $region33: #{resnet_block_forward.1} parent=5 // pred_check
      _
    $region34: #{resnet_block_forward.1} parent=5 // pred_check_branch
      %166 = sbr.rel (%p163) target = $region36
    $region35: #{resnet_block_forward.1} parent=5 // pred_region
      %s167 = ssub.s32 %s10, 1
      %p168 = scmp.lt.s32.totalorder %s15, 1
      %s169 = scalar_select %p168, %s15, 1
      %s170 = smul.addr %s169, 2
      %s171 = smul.addr %s170, 4
      %s172 = scalar_lea.vmem %s0, %s171
      %p173 = pneg %p36
      %p174 = pneg %p33
      %p175 = pneg %p57
      %p176 = pneg %p54
      %p177 = pneg %p78
      %p178 = pneg %p75
      %p179 = pneg %p99
      %p180 = pneg %p96
      %p181 = pneg %p125
      %p182 = pneg %p122
      %p183 = scmp.lt.s32.totalorder %s15, 1
      %s184 = scalar_select %p183, %s15, 1
      %s185 = smul.addr %s184, 2
      %s186 = smul.addr %s185, 8
      %s187 = scalar_lea.vmem %s4, %s186
      %p188 = scmp.lt.s32.totalorder %s15, 1
      %s189 = scalar_select %p188, %s15, 1
      %s190 = smul.addr %s189, 2
      %s191 = smul.addr %s190, 4
      %s192 = scalar_lea.vmem %s0, %s191
      %p193 = scmp.lt.s32.totalorder %s15, 1
      %s194 = scalar_select %p193, %s15, 1
      %s195 = smul.addr %s194, 2
      %s196 = smul.addr %s195, 8
      %s197 = scalar_lea.vmem %s4, %s196
      %199 = vst [vmem:[#allocation2] sm:$0xff] 0.0
      %vm200 = vcmask 273408
      %201 = vst.msk [vmem:[#allocation2 + $0x8] sm:$0xf] %vm200, 0.0
      %v202 = vld [vmem:[%s192] sm:$0xff]
      %204 = vrot.lane.b32.xlu0 %v202, 17
      %v205 = vpop.permute.xlu0 %204
      %v206 = vrot.slane %v205, 4
      %vm207 = vcmask 138240
      %v208 = vsel %vm207, %v206, %v205
      %vm211 = vcmask 1043592
      %vm212 = vcmask 1047556
      %vm213 = vmor %vm212, %vm211
      %214 = vst.msk [vmem:[#allocation2] sm:$0xff] %vm213, %v208
      %vm215 = vcmask 134144
      %216 = vst.msk [vmem:[#allocation2 + $0x8] sm:$0xf] %vm215, %v206
      %v217 = vlaneseq
      %v218 = vand.u32 %v217, 127
      %v219 = vadd.s32 %v218, 128
      %vm220 = vcmp.lt.s32.totalorder %v218, 0
      %v221 = vsub.s32 0, %v218
      %v222 = vsel %vm220, %v221, %v218
      %v223 = vshrl.u32 %v222, 4
      %v224 = vand.u32 %v222, 15
      %v225 = vsub.s32 0, %v224
      %v226 = vsel %vm220, %v225, %v224
      %vm227 = vcmp.lt.s32.totalorder %v219, 0
      %v228 = vsub.s32 0, %v219
      %v229 = vsel %vm227, %v228, %v219
      %v230 = vshrl.u32 %v229, 4
      %v231 = vand.u32 %v229, 15
      %v232 = vsub.s32 0, %v231
      %v233 = vsel %vm227, %v232, %v231
      %vm234 = vcmp.ne.s32.totalorder %v226, 0
      %vm235 = vcmp.ne.s32.totalorder %v233, 0
      %vm236 = vcmp.lt.s32.totalorder %v226, 0
      %vm237 = vcmp.lt.s32.totalorder %v233, 0
      %vm238 = vmand %vm236, %vm234
      %vm239 = vmand %vm237, %vm235
      %v240 = vadd.s32 %v226, 16
      %v241 = vadd.s32 %v233, 16
      %v242 = vsel %vm238, %v240, %v226
      %v243 = vsel %vm239, %v241, %v233
      %v244 = vld [vmem:[#allocation2] sm:$0xff]
      %v245 = vadd.s32 %v242, 4294967295
      %v246 = vadd.s32 %v243, 4294967295
      %vm247 = vcmp.ge.s32.totalorder %v245, 0
      %vm248 = vcmp.ge.s32.totalorder %v246, 0
      %vm249 = vcmp.lt.s32.totalorder %v245, 16
      %vm250 = vcmp.lt.s32.totalorder %v246, 16
      %vm251 = vmand %vm247, %vm249
      %vm252 = vmand %vm248, %vm250
      %v254 = vcombine.high %v244, %v244
      %v256 = vsel %vm251, %v244, 0.0
      %v257 = vsel %vm252, %v254, 0.0
      %258 = vst [vmem:[#allocation3] sm:$0xf] %v256
      %259 = vst [vmem:[#allocation3 + $0x8] sm:$0xf] %v257
      %v260 = vld [vmem:[#allocation2] sm:$0xff]
      %v261 = vld [vmem:[#allocation2 + $0x8] sm:$0xf]
      %v264 = vcombine.low %v260, %v260
      %v265 = vcombine.low %v261, %v261
      %266 = vrot.lane.b32.xlu0 %v264, 127
      %v267 = vpop.permute.xlu0 %266
      %268 = vrot.lane.b32.xlu0 %v260, 127
      %v269 = vpop.permute.xlu0 %268
      %270 = vrot.lane.b32.xlu0 %v265, 127
      %v271 = vpop.permute.xlu0 %270
      %vm272 = vcmask 1039360
      %v273 = vsel %vm272, %v267, %v269
      %v274 = vsel %vm272, %v269, %v271
      %277 = vst [vmem:[#allocation3] sm:$0xf0] %v273
      %278 = vst [vmem:[#allocation3 + $0x8] sm:$0xf0] %v274
      %v279 = vld [vmem:[#allocation2] sm:$0xff]
      %v280 = vld [vmem:[#allocation2 + $0x8] sm:$0xf]
      %v281 = vadd.s32 %v242, 1
      %v282 = vadd.s32 %v243, 1
      %vm283 = vcmp.ge.s32.totalorder %v281, 0
      %vm284 = vcmp.ge.s32.totalorder %v282, 0
      %vm285 = vcmp.lt.s32.totalorder %v281, 16
      %vm286 = vcmp.lt.s32.totalorder %v282, 16
      %vm287 = vmand %vm283, %vm285
      %vm288 = vmand %vm284, %vm286
      %v291 = vcombine.high %v279, %v279
      %292 = vrot.lane.b32.xlu0 %v279, 126
      %v293 = vpop.permute.xlu0 %292
      %294 = vrot.lane.b32.xlu0 %v291, 126
      %v295 = vpop.permute.xlu0 %294
      %296 = vrot.lane.b32.xlu0 %v280, 126
      %v297 = vpop.permute.xlu0 %296
      %vm298 = vcmask 1031168
      %v299 = vsel %vm298, %v293, %v295
      %v300 = vsel %vm298, %v295, %v297
      %v303 = vsel %vm287, %v299, 0.0
      %v304 = vsel %vm288, %v300, 0.0
      %305 = vst [vmem:[#allocation3 + $0x10] sm:$0xf] %v303
      %306 = vst [vmem:[#allocation3 + $0x18] sm:$0xf] %v304
      %v307 = vld [vmem:[#allocation2] sm:$0xff]
      %v308 = vld [vmem:[#allocation2 + $0x8] sm:$0xf]
      %v311 = vcombine.high %v307, %v307
      %312 = vrot.lane.b32.xlu0 %v307, 112
      %v313 = vpop.permute.xlu0 %312
      %314 = vrot.lane.b32.xlu0 %v311, 112
      %v315 = vpop.permute.xlu0 %314
      %316 = vrot.lane.b32.xlu0 %v308, 112
      %v317 = vpop.permute.xlu0 %316
      %vm318 = vcmask 916480
      %v319 = vsel %vm318, %v313, %v315
      %v320 = vsel %vm318, %v315, %v317
      %v323 = vsel %vm251, %v319, 0.0
      %v324 = vsel %vm252, %v320, 0.0
      %v327 = vrot.slane %v323, 4
      %v328 = vrot.slane %v324, 4
      %331 = vst [vmem:[#allocation3 + $0x10] sm:$0xf0] %v327
      %332 = vst [vmem:[#allocation3 + $0x18] sm:$0xf0] %v328
      %v333 = vld [vmem:[#allocation2] sm:$0xff]
      %v334 = vld [vmem:[#allocation2 + $0x8] sm:$0xf]
      %v337 = vcombine.high %v333, %v333
      %338 = vrot.lane.b32.xlu0 %v333, 111
      %v339 = vpop.permute.xlu0 %338
      %340 = vrot.lane.b32.xlu0 %v337, 111
      %v341 = vpop.permute.xlu0 %340
      %342 = vrot.lane.b32.xlu0 %v334, 111
      %v343 = vpop.permute.xlu0 %342
      %vm344 = vcmask 908288
      %v345 = vsel %vm344, %v339, %v341
      %v346 = vsel %vm344, %v341, %v343
      %349 = vst [vmem:[#allocation3 + $0x20] sm:$0xf] %v345
      %350 = vst [vmem:[#allocation3 + $0x28] sm:$0xf] %v346
      %v351 = vld [vmem:[#allocation2] sm:$0xff]
      %v352 = vld [vmem:[#allocation2 + $0x8] sm:$0xf]
      %v355 = vcombine.high %v351, %v351
      %356 = vrot.lane.b32.xlu0 %v351, 110
      %v357 = vpop.permute.xlu0 %356
      %358 = vrot.lane.b32.xlu0 %v355, 110
      %v359 = vpop.permute.xlu0 %358
      %360 = vrot.lane.b32.xlu0 %v352, 110
      %v361 = vpop.permute.xlu0 %360
      %vm362 = vcmask 900096
      %v363 = vsel %vm362, %v357, %v359
      %v364 = vsel %vm362, %v359, %v361
      %v367 = vsel %vm287, %v363, 0.0
      %v368 = vsel %vm288, %v364, 0.0
      %v371 = vrot.slane %v367, 4
      %v372 = vrot.slane %v368, 4
      %375 = vst [vmem:[#allocation3 + $0x20] sm:$0xf0] %v371
      %376 = vst [vmem:[#allocation3 + $0x28] sm:$0xf0] %v372
      %v377 = vld [vmem:[#allocation2] sm:$0xff]
      %v378 = vld [vmem:[#allocation2 + $0x8] sm:$0xf]
      %v381 = vcombine.high %v377, %v377
      %382 = vrot.lane.b32.xlu0 %v377, 96
      %v383 = vpop.permute.xlu0 %382
      %384 = vrot.lane.b32.xlu0 %v381, 96
      %v385 = vpop.permute.xlu0 %384
      %386 = vrot.lane.b32.xlu0 %v378, 96
      %v387 = vpop.permute.xlu0 %386
      %vm388 = vcmask 785408
      %v389 = vsel %vm388, %v383, %v385
      %v390 = vsel %vm388, %v385, %v387
      %v393 = vsel %vm251, %v389, 0.0
      %v394 = vsel %vm252, %v390, 0.0
      %395 = vst [vmem:[#allocation3 + $0x30] sm:$0xf] %v393
      %396 = vst [vmem:[#allocation3 + $0x38] sm:$0xf] %v394
      %v397 = vld [vmem:[#allocation2] sm:$0xff]
      %v398 = vld [vmem:[#allocation2 + $0x8] sm:$0xf]
      %v401 = vcombine.low %v397, %v397
      %v402 = vcombine.low %v398, %v398
      %403 = vrot.lane.b32.xlu0 %v401, 95
      %v404 = vpop.permute.xlu0 %403
      %405 = vrot.lane.b32.xlu0 %v397, 95
      %v406 = vpop.permute.xlu0 %405
      %407 = vrot.lane.b32.xlu0 %v402, 95
      %v408 = vpop.permute.xlu0 %407
      %vm409 = vcmask 777216
      %v410 = vsel %vm409, %v404, %v406
      %v411 = vsel %vm409, %v406, %v408
      %414 = vst [vmem:[#allocation3 + $0x30] sm:$0xf0] %v410
      %415 = vst [vmem:[#allocation3 + $0x38] sm:$0xf0] %v411
      %v416 = vld [vmem:[#allocation2] sm:$0xff]
      %v417 = vld [vmem:[#allocation2 + $0x8] sm:$0xf]
      %v420 = vcombine.high %v416, %v416
      %421 = vrot.lane.b32.xlu0 %v416, 94
      %v422 = vpop.permute.xlu0 %421
      %423 = vrot.lane.b32.xlu0 %v420, 94
      %v424 = vpop.permute.xlu0 %423
      %425 = vrot.lane.b32.xlu0 %v417, 94
      %v426 = vpop.permute.xlu0 %425
      %vm427 = vcmask 769024
      %v428 = vsel %vm427, %v422, %v424
      %v429 = vsel %vm427, %v424, %v426
      %v432 = vsel %vm287, %v428, 0.0
      %v433 = vsel %vm288, %v429, 0.0
      %434 = vst [vmem:[#allocation3 + $0x40] sm:$0xf] %v432
      %435 = vst [vmem:[#allocation3 + $0x48] sm:$0xf] %v433
      %v436 = vld [vmem:[%s1] sm:$0xf]
      %v437 = vld [vmem:[#allocation3] sm:$0xff]
      %v438 = vld [vmem:[#allocation3 + $0x8] sm:$0xff]
      %v439 = vld [vmem:[#allocation3 + $0x10] sm:$0xff]
      %v440 = vld [vmem:[#allocation3 + $0x18] sm:$0xff]
      %v441 = vld [vmem:[#allocation3 + $0x20] sm:$0xff]
      %v442 = vld [vmem:[#allocation3 + $0x28] sm:$0xff]
      %v443 = vld [vmem:[#allocation3 + $0x30] sm:$0xff]
      %v444 = vld [vmem:[#allocation3 + $0x38] sm:$0xff]
      %v445 = vld [vmem:[#allocation3 + $0x40] sm:$0xf]
      %v446 = vld [vmem:[#allocation3 + $0x48] sm:$0xf]
      %v447 = vpack.c.bf16 %v439, %v437
      %v448 = vpack.c.bf16 %v440, %v438
      %v449 = vpack.c.bf16 %v443, %v441
      %v450 = vpack.c.bf16 %v444, %v442
      %v451 = vpack.c.bf16 %v445, %v445
      %v452 = vpack.c.bf16 %v446, %v446
      %vm453 = vcmask 293888
      %v455 = vsel %vm453, %v436, 0
      %vm457 = vcmask 1041408
      %v459 = vsel %vm457, %v451, 0
      %v462 = vsel %vm457, %v452, 0
      %464 = vmatprep.subr.bf16.mxu0 %v448
      %465 = vmatpush1.bf16.msra.mxu0 %v447
      %466 = vmatprep.subr.bf16.mxu0 %v450
      %467 = vmatpush1.bf16.msra.mxu0 %v449
      %468 = vmatprep.subr.bf16.mxu0 %v462
      %469 = vmatpush1.bf16.msra.mxu0 %v459
      %470 = vmatprep.subr.bf16.mxu0 0
      %471 = vmatpush1.bf16.msra.mxu0 0
      %472 = vmatprep.subr.bf16.mxu0 0
      %473 = vmatpush1.bf16.msra.mxu0 0
      %474 = vmatprep.subr.bf16.mxu0 0
      %475 = vmatpush1.bf16.msra.mxu0 0
      %476 = vmatprep.subr.bf16.mxu0 0
      %477 = vmatpush1.bf16.msra.mxu0 0
      %478 = vmatprep.subr.bf16.mxu0 0
      %479 = vmatpush1.bf16.msra.mxu0 0
      %480 = vmatprep.subr.bf16.mxu0 0
      %481 = vmatpush1.bf16.msra.mxu0 0
      %482 = vmatprep.subr.bf16.mxu0 0
      %483 = vmatpush1.bf16.msra.mxu0 0
      %484 = vmatprep.subr.bf16.mxu0 0
      %485 = vmatpush1.bf16.msra.mxu0 0
      %486 = vmatprep.subr.bf16.mxu0 0
      %487 = vmatpush1.bf16.msra.mxu0 0
      %488 = vmatprep.subr.bf16.mxu0 0
      %489 = vmatpush1.bf16.msra.mxu0 0
      %490 = vmatprep.subr.bf16.mxu0 0
      %491 = vmatpush1.bf16.msra.mxu0 0
      %492 = vmatprep.subr.bf16.mxu0 0
      %493 = vmatpush1.bf16.msra.mxu0 0
      %494 = vmatprep.subr.bf16.mxu0 0
      %495 = vmatpush1.bf16.msra.mxu0 0
      %496 = vmatprep.mubr.bf16.mxu0 0
      %497 = vmatmul.mubr.bf16.gmra.mrb[0].mxu0 %v455
      %v498 = vpop.f32.mrb[0].mxu0
      %v499 = vadd.f32 0.0, %v498
      %v500 = vpop.f32.mrb[0].mxu0
      %v501 = vadd.f32 0.0, %v500
      %v502 = vpop.f32.mrb[0].mxu0
      %v503 = vpop.f32.mrb[0].mxu0
      %504 = vdwg.mxu0
      %v505 = vld [vmem:[%s2] sm:$0xff]
      %507 = vset.pattern.permute.xlu0 0
      %508 = vperm.xlu0 %507, %v505
      %v509 = vpop.permute.xlu0 %508
      %v511 = vmul.f32 %v499, %v509
      %v512 = vmul.f32 %v501, %v509
      %v513 = vld [vmem:[%s3] sm:$0xff]
      %515 = vset.pattern.permute.xlu0 0
      %516 = vperm.xlu0 %515, %v513
      %v517 = vpop.permute.xlu0 %516
      %v519 = vadd.f32 %v511, %v517
      %v520 = vadd.f32 %v512, %v517
      %v521 = vmax.f32 %v519, 0.0
      %v522 = vmax.f32 %v520, 0.0
      %523 = vst [vmem:[%s197] sm:$0xff] %v521
      %524 = vst [vmem:[%s197 + $0x8] sm:$0xff] %v522
      %p525 = scmp.lt.s32.totalorder %s15, 1
      %s526 = scalar_select %p525, %s15, 1
      %s527 = smul.addr %s526, 2
      %s528 = smul.addr %s527, 8
      %s529 = scalar_lea.vmem %s4, %s528
      // Predicated region
      $region37: #{resnet_block_forward.1} parent=35 // pred_check
        %p530 = pneg %p122
      $region38: #{resnet_block_forward.1} parent=35 // pred_check_branch
        %532 = sbr.rel (%p530) target = $region40
      $region39: #{resnet_block_forward.1} parent=35 // pred_region
        _
      $region40: #{resnet_block_forward.1} parent=35 // pred_fallthru
        _
    $region36: #{resnet_block_forward.1} parent=5 // pred_fallthru
      _
    %p533 = scmp.le.s32.totalorder 2, %s10
    // Predicated region
    $region41: #{resnet_block_forward.1} parent=5 // pred_check
      %p534 = pneg %p533
    $region42: #{resnet_block_forward.1} parent=5 // pred_check_branch
      %536 = sbr.rel (%p534) target = $region44
    $region43: #{resnet_block_forward.1} parent=5 // pred_region
      %s537 = ssub.s32 %s10, 2
      // Predicated region
      $region45: #{resnet_block_forward.1} parent=43 // pred_check
        %p538 = pneg %p128
      $region46: #{resnet_block_forward.1} parent=43 // pred_check_branch
        %540 = sbr.rel (%p538) target = $region48
      $region47: #{resnet_block_forward.1} parent=43 // pred_region
        %p541 = scmp.lt.s32.totalorder %s16, 1
        %s542 = scalar_select %p541, %s16, 1
        %s543 = smul.addr %s542, 2
        %s544 = smul.addr %s543, 8
        %s545 = scalar_lea.vmem %s4, %s544
      $region48: #{resnet_block_forward.1} parent=43 // pred_fallthru
        _
    $region44: #{resnet_block_forward.1} parent=5 // pred_fallthru
      _
  $region6: #{resnet_block_forward.1} parent=0 // loop_footer
    %s14 = sadd.s32 1, %s10
  $region7: #{resnet_block_forward.1} parent=0 // loop_footer_branch
    %9 = sbr.rel target = $region3
  $region8: #{resnet_block_forward.1} parent=0 // loop_exit
    _

</llo_original>
